<compile_context>
chip_gen: v5e
topology: v5e:2x2
jax: 0.10.0
libtpu: 0.0.40
codegen_flags: <defaults>
</compile_context>

<pallas_src>
import functools

import jax
import jax.numpy as jnp
from jax.experimental import pallas as pl
from jax.experimental.pallas import tpu as pltpu


def _label_smoothing_kernel(x_ref, t_ref, batch_ref, *, padding_idx):
    x = x_ref[...]          # (row_tile, V) log-probs
    t = t_ref[...]          # (row_tile, V) probs

    # Fused mask: zeroed padding column AND KLDivLoss's "t <= 0 contributes 0" rule.
    col = jax.lax.broadcasted_iota(jnp.int32, t.shape, 1)
    valid = (t > 0.0) & (col != padding_idx)

    # KLDivLoss(reduction='none'): t * (log t - x), 0 where invalid.
    t_safe = jnp.where(valid, t, 1.0)
    loss = jnp.where(valid, t * (jnp.log(t_safe) - x), 0.0)

    # Per-row sums, stored lane-dense as a (1, row_tile) slab (avoids masked
    # lane-width-1 stores / 32-byte HBM writebacks).
    batch_ref[...] = jnp.sum(loss, axis=1, keepdims=True).T


def label_smoothing_loss(x, target, *, padding_idx, row_tile=None,
                         target_block_bytes=4 << 20):
    """Returns (sum_loss: scalar f32, batch_loss: (N,) f32)."""
    N, V = x.shape
    assert target.shape == (N, V)

    # ---- pick the row tile (memory-bound kernel: make blocks a few MiB) ----
    if row_tile is None:
        rows = (target_block_bytes // (V * 4)) // 128 * 128
        row_tile = max(128, rows)
    # TODO(synk): for very large vocabularies (V >= ~8k) add a second
    # ("arbitrary", last) grid axis over V with a per-row VMEM accumulator.

    if row_tile >= N:
        # Single full-extent block: no (8,128) divisibility needed.
        row_tile = N
        n_pad = N
        grid = (1,)
    else:
        assert row_tile % 128 == 0, "tiled path needs row_tile % 128 == 0"
        n_blocks = pl.cdiv(N, row_tile)
        n_pad = n_blocks * row_tile
        grid = (n_blocks,)

    if n_pad != N:
        pad = n_pad - N
        # Padded rows have target == 0 -> loss contribution is exactly 0.
        x = jnp.pad(x, ((0, pad), (0, 0)))
        target = jnp.pad(target, ((0, pad), (0, 0)))

    # ---- VMEM budget: 2 inputs x 2 pipeline buffers x block + small output ----
    block_bytes = row_tile * V * 4
    vmem_needed = 4 * block_bytes + 4 * row_tile * 4 + (1 << 20)
    vmem_limit = min(48 << 20, max(vmem_needed, 16 << 20))   # safe on v5e/v6e/v7x

    kernel = functools.partial(_label_smoothing_kernel, padding_idx=padding_idx)

    batch = pl.pallas_call(
        kernel,
        out_shape=jax.ShapeDtypeStruct((1, n_pad), jnp.float32),  # lane-dense row sums
        grid_spec=pltpu.PrefetchScalarGridSpec(
            num_scalar_prefetch=0,
            grid=grid,
            in_specs=[
                pl.BlockSpec((row_tile, V), lambda i: (i, 0)),
                pl.BlockSpec((row_tile, V), lambda i: (i, 0)),
            ],
            out_specs=pl.BlockSpec((1, row_tile), lambda i: (0, i)),
        ),
        compiler_params=pltpu.CompilerParams(
            dimension_semantics=("parallel",),   # no resident accumulator -> shardable
            vmem_limit_bytes=int(vmem_limit),
        ),
    )(x, target)

    batch_loss = batch[0, :N]
    sum_loss = jnp.sum(batch_loss)      # global sum done in the wrapper
    return sum_loss, batch_loss


def _reference(x, target, padding_idx):
    t = target.at[:, padding_idx].set(0.0)
    loss = jnp.where(t > 0, t * (jnp.log(jnp.where(t > 0, t, 1.0)) - x), 0.0)
    return jnp.sum(loss), jnp.sum(loss, axis=1)


if __name__ == "__main__":
    padding_idx = 3

    # Small demo shapes; N deliberately not a multiple of the tile to exercise
    # the tail-padding path.
    N, V = 300, 128

    key = jax.random.PRNGKey(0)
    kx, kt = jax.random.split(key)
    x = jax.nn.log_softmax(jax.random.normal(kx, (N, V), dtype=jnp.float32), axis=-1)
    target = jax.nn.softmax(jax.random.normal(kt, (N, V), dtype=jnp.float32), axis=-1)

    ref_sum, ref_batch = _reference(x, target, padding_idx)

    # 1) Auto tile selection (single full block at this small N).
    s1, b1 = label_smoothing_loss(x, target, padding_idx=padding_idx)
    # 2) Forced multi-block tiling (row_tile=128 -> grid of 3, lane-dense output,
    #    tail padding) to exercise the pipelined path.
    s2, b2 = label_smoothing_loss(x, target, padding_idx=padding_idx, row_tile=128)
    jax.block_until_ready((s1, b1, s2, b2))

    for s, b in ((s1, b1), (s2, b2)):
        assert b.shape == (N,)
        assert jnp.allclose(s, ref_sum, rtol=1e-5, atol=1e-5), (s, ref_sum)
        assert jnp.allclose(b, ref_batch, rtol=1e-5, atol=1e-5)

    print("KERNEL_OK")
</pallas_src>

<mosaic_0001>
module attributes {stable_mosaic.version = 11 : i64} {
  func.func @_label_smoothing_kernel(%arg0: i32, %arg1: memref<300x128xf32, #tpu.memory_space<vmem>>, %arg2: memref<300x128xf32, #tpu.memory_space<vmem>>, %arg3: memref<1x300xf32, #tpu.memory_space<vmem>>) attributes {dimension_semantics = [#tpu.dimension_semantics<parallel>], iteration_bounds = array<i64: 1>, scalar_prefetch = 0 : i64, scratch_operands = 0 : i64, tpu.core_type = #tpu.core_type<tc>, window_params = [{transform_indices = @transform_0, window_bounds = array<i64: 300, 128>}, {transform_indices = @transform_1, window_bounds = array<i64: 300, 128>}, {transform_indices = @transform_2, window_bounds = array<i64: 1, 300>}]} {
    %c0 = arith.constant 0 : index
    %c0_0 = arith.constant 0 : index
    %0 = vector.load %arg1[%c0, %c0_0] : memref<300x128xf32, #tpu.memory_space<vmem>>, vector<300x128xf32>
    %c0_1 = arith.constant 0 : index
    %c0_2 = arith.constant 0 : index
    %1 = vector.load %arg2[%c0_1, %c0_2] : memref<300x128xf32, #tpu.memory_space<vmem>>, vector<300x128xf32>
    %2 = tpu.iota {dimensions = array<i32: 1>} : vector<300x128xi32>
    %cst = arith.constant 0.000000e+00 : f32
    %3 = vector.broadcast %cst : f32 to vector<300x128xf32>
    %4 = arith.cmpf ogt, %1, %3 : vector<300x128xf32>
    %c3_i32 = arith.constant 3 : i32
    %5 = vector.broadcast %c3_i32 : i32 to vector<300x128xi32>
    %6 = arith.cmpi ne, %2, %5 : vector<300x128xi32>
    %7 = arith.andi %4, %6 : vector<300x128xi1>
    %cst_3 = arith.constant 1.000000e+00 : f32
    %8 = vector.broadcast %cst_3 : f32 to vector<300x128xf32>
    %9 = arith.select %7, %1, %8 : vector<300x128xi1>, vector<300x128xf32>
    %10 = math.log %9 : vector<300x128xf32>
    %11 = arith.subf %10, %0 : vector<300x128xf32>
    %12 = arith.mulf %1, %11 : vector<300x128xf32>
    %cst_4 = arith.constant 0.000000e+00 : f32
    %13 = vector.broadcast %cst_4 : f32 to vector<300x128xf32>
    %14 = arith.select %7, %12, %13 : vector<300x128xi1>, vector<300x128xf32>
    %cst_5 = arith.constant dense<0.000000e+00> : vector<300xf32>
    %15 = vector.multi_reduction <add>, %14, %cst_5 [1] : vector<300x128xf32> to vector<300xf32>
    %16 = vector.shape_cast %15 : vector<300xf32> to vector<300x1xf32>
    %17 = tpu.transpose %16, [1, 0] : vector<300x1xf32> -> vector<1x300xf32>
    %c0_6 = arith.constant 0 : index
    %c0_7 = arith.constant 0 : index
    %18 = vector.load %arg3[%c0_6, %c0_7] : memref<1x300xf32, #tpu.memory_space<vmem>>, vector<1x300xf32>
    tpu.vector_store %arg3[%c0_6, %c0_7], %17 {strides = array<i32>} : memref<1x300xf32, #tpu.memory_space<vmem>>, vector<1x300xf32>,
    return
  }
  func.func @transform_0(%arg0: i32) -> (i32, i32) {
    %c0_i32 = arith.constant 0 : i32
    %c0_i32_0 = arith.constant 0 : i32
    return %arg0, %c0_i32 : i32, i32
  }
  func.func @transform_1(%arg0: i32) -> (i32, i32) {
    %c0_i32 = arith.constant 0 : i32
    %c0_i32_0 = arith.constant 0 : i32
    return %arg0, %c0_i32 : i32, i32
  }
  func.func @transform_2(%arg0: i32) -> (i32, i32) {
    %c0_i32 = arith.constant 0 : i32
    %c0_i32_0 = arith.constant 0 : i32
    return %c0_i32, %arg0 : i32, i32
  }
}

</mosaic_0001>

<llo_original>
// kernel: tpu_custom_call.1
$region0: #{tpu_custom_call.1}
  #allocation0 [shape = 'u32[]', space=smem, size = 0x4, offset = 0x4, fixed_abs, tag = 'smem constant byte address 0x4 - core index']
  #allocation1 [shape = 'u32[72,128]{1,0:T(1,128)}', space=vmem, size = 0x9000, scoped, tag = 'internal scratch']
  %s0 = inlined_call_operand.hbm [shape: f32[300,128], index: 0, kind: input, shape index: {}]
  %s1 = inlined_call_operand.hbm [shape: f32[300,128], index: 1, kind: input, shape index: {}]
  %s2 = inlined_call_operand.hbm [shape: f32[1,300], index: 2, kind: output, shape index: {}]
  %s3 = sld [smem:[#allocation0]]
  $region26: #{tpu_custom_call.1} parent=0
    _
  %s5 = ssub.s32 1, %s3
  %s6 = scalar_select 0, %s5, %s3
  $region1: #{tpu_custom_call.1} parent=0
    #allocation2 [shape = 'u8[155648]{0}', space=vmem, size = 0x26000, scoped, tag = 'input window, operand 0, single buffered']
    #allocation3 [shape = 's32[1]{0}', space=sflag, size = 0x4, scoped, tag = 'scoped memory for tpu_custom_call.1']
    #allocation4 [shape = 's32[1]{0}', space=sflag, size = 0x4, scoped, tag = 'scoped memory for tpu_custom_call.1']
    #allocation5 [shape = 'u8[155648]{0}', space=vmem, size = 0x26000, scoped, tag = 'input window, operand 1, single buffered']
    #allocation6 [shape = 's32[1]{0}', space=sflag, size = 0x4, scoped, tag = 'scoped memory for tpu_custom_call.1']
    #allocation7 [shape = 'u8[1536]{0}', space=vmem, size = 0x800, scoped, tag = 'output window, operand 0, single buffered']
    %7 = vsyncpa [#allocation3], 0
    %8 = vsyncpa [#allocation6], 0
    %9 = vsyncpa [#allocation4], 0
    // Predicated region
    $region2: #{tpu_custom_call.1} parent=1 // pred_check
      _
    $region3: #{tpu_custom_call.1} parent=1 // pred_check_branch
      %11 = sbr.rel (0) target = $region5
    $region4: #{tpu_custom_call.1} parent=1 // pred_region
      %13 = vsyncadd [#allocation3], 0
      %s14 = sshll.u32 %s0, 4
      %s15 = int_to_ptr.hbm [resolvable:$true] %s14
      %s16 = sshll.u32 [#allocation2], 4
      %s17 = int_to_ptr.vmem [resolvable:$true] %s16
      %22 = dma.hbm_to_vmem [thread:$0]  %s15, 4864, %s17, [#allocation3], 128, 128, 8
    $region5: #{tpu_custom_call.1} parent=1 // pred_fallthru
      _
    // Predicated region
    $region6: #{tpu_custom_call.1} parent=1 // pred_check
      _
    $region7: #{tpu_custom_call.1} parent=1 // pred_check_branch
      %24 = sbr.rel (0) target = $region9
    $region8: #{tpu_custom_call.1} parent=1 // pred_region
      %26 = vsyncadd [#allocation6], 0
      %s27 = sshll.u32 %s1, 4
      %s28 = int_to_ptr.hbm [resolvable:$true] %s27
      %s29 = sshll.u32 [#allocation5], 4
      %s30 = int_to_ptr.vmem [resolvable:$true] %s29
      %35 = dma.hbm_to_vmem [thread:$0]  %s28, 4864, %s30, [#allocation6], 128, 128, 8
    $region9: #{tpu_custom_call.1} parent=1 // pred_fallthru
      _
    // Predicated region
    $region10: #{tpu_custom_call.1} parent=1 // pred_check
      _
    $region11: #{tpu_custom_call.1} parent=1 // pred_check_branch
      %37 = sbr.rel (0) target = $region13
    $region12: #{tpu_custom_call.1} parent=1 // pred_region
      %39 = dma.done [#allocation3], 4864
    $region13: #{tpu_custom_call.1} parent=1 // pred_fallthru
      _
    // Predicated region
    $region14: #{tpu_custom_call.1} parent=1 // pred_check
      _
    $region15: #{tpu_custom_call.1} parent=1 // pred_check_branch
      %41 = sbr.rel (0) target = $region17
    $region16: #{tpu_custom_call.1} parent=1 // pred_region
      %43 = dma.done [#allocation6], 4864
    $region17: #{tpu_custom_call.1} parent=1 // pred_fallthru
      _
    %v44 = vld [vmem:[#allocation2] sm:$0xff]
    %v45 = vld [vmem:[#allocation2 + $0x8] sm:$0xff]
    %v46 = vld [vmem:[#allocation2 + $0x10] sm:$0xff]
    %v47 = vld [vmem:[#allocation2 + $0x18] sm:$0xff]
    %v48 = vld [vmem:[#allocation2 + $0x20] sm:$0xff]
    %v49 = vld [vmem:[#allocation2 + $0x28] sm:$0xff]
    %v50 = vld [vmem:[#allocation2 + $0x30] sm:$0xff]
    %v51 = vld [vmem:[#allocation2 + $0x38] sm:$0xff]
    %v52 = vld [vmem:[#allocation2 + $0x40] sm:$0xff]
    %v53 = vld [vmem:[#allocation2 + $0x48] sm:$0xff]
    %v54 = vld [vmem:[#allocation2 + $0x50] sm:$0xff]
    %v55 = vld [vmem:[#allocation2 + $0x58] sm:$0xff]
    %v56 = vld [vmem:[#allocation2 + $0x60] sm:$0xff]
    %v57 = vld [vmem:[#allocation2 + $0x68] sm:$0xff]
    %v58 = vld [vmem:[#allocation2 + $0x70] sm:$0xff]
    %v59 = vld [vmem:[#allocation2 + $0x78] sm:$0xff]
    %v60 = vld [vmem:[#allocation2 + $0x80] sm:$0xff]
    %v61 = vld [vmem:[#allocation2 + $0x88] sm:$0xff]
    %v62 = vld [vmem:[#allocation2 + $0x90] sm:$0xff]
    %v63 = vld [vmem:[#allocation2 + $0x98] sm:$0xff]
    %v64 = vld [vmem:[#allocation2 + $0xa0] sm:$0xff]
    %v65 = vld [vmem:[#allocation2 + $0xa8] sm:$0xff]
    %v66 = vld [vmem:[#allocation2 + $0xb0] sm:$0xff]
    %v67 = vld [vmem:[#allocation2 + $0xb8] sm:$0xff]
    %v68 = vld [vmem:[#allocation2 + $0xc0] sm:$0xff]
    %v69 = vld [vmem:[#allocation2 + $0xc8] sm:$0xff]
    %v70 = vld [vmem:[#allocation2 + $0xd0] sm:$0xff]
    %v71 = vld [vmem:[#allocation2 + $0xd8] sm:$0xff]
    %v72 = vld [vmem:[#allocation2 + $0xe0] sm:$0xff]
    %v73 = vld [vmem:[#allocation2 + $0xe8] sm:$0xff]
    %v74 = vld [vmem:[#allocation2 + $0xf0] sm:$0xff]
    %v75 = vld [vmem:[#allocation2 + $0xf8] sm:$0xff]
    %v76 = vld [vmem:[#allocation2 + $0x100] sm:$0xff]
    %v77 = vld [vmem:[#allocation2 + $0x108] sm:$0xff]
    %v78 = vld [vmem:[#allocation2 + $0x110] sm:$0xff]
    %v79 = vld [vmem:[#allocation2 + $0x118] sm:$0xff]
    %v80 = vld [vmem:[#allocation2 + $0x120] sm:$0xff]
    %v81 = vld [vmem:[#allocation2 + $0x128] sm:$0xf]
    %v82 = vld [vmem:[#allocation5] sm:$0xff]
    %v83 = vld [vmem:[#allocation5 + $0x8] sm:$0xff]
    %v84 = vld [vmem:[#allocation5 + $0x10] sm:$0xff]
    %v85 = vld [vmem:[#allocation5 + $0x18] sm:$0xff]
    %v86 = vld [vmem:[#allocation5 + $0x20] sm:$0xff]
    %v87 = vld [vmem:[#allocation5 + $0x28] sm:$0xff]
    %v88 = vld [vmem:[#allocation5 + $0x30] sm:$0xff]
    %v89 = vld [vmem:[#allocation5 + $0x38] sm:$0xff]
    %v90 = vld [vmem:[#allocation5 + $0x40] sm:$0xff]
    %v91 = vld [vmem:[#allocation5 + $0x48] sm:$0xff]
    %v92 = vld [vmem:[#allocation5 + $0x50] sm:$0xff]
    %v93 = vld [vmem:[#allocation5 + $0x58] sm:$0xff]
    %v94 = vld [vmem:[#allocation5 + $0x60] sm:$0xff]
    %v95 = vld [vmem:[#allocation5 + $0x68] sm:$0xff]
    %v96 = vld [vmem:[#allocation5 + $0x70] sm:$0xff]
    %v97 = vld [vmem:[#allocation5 + $0x78] sm:$0xff]
    %v98 = vld [vmem:[#allocation5 + $0x80] sm:$0xff]
    %v99 = vld [vmem:[#allocation5 + $0x88] sm:$0xff]
    %v100 = vld [vmem:[#allocation5 + $0x90] sm:$0xff]
    %v101 = vld [vmem:[#allocation5 + $0x98] sm:$0xff]
    %v102 = vld [vmem:[#allocation5 + $0xa0] sm:$0xff]
    %v103 = vld [vmem:[#allocation5 + $0xa8] sm:$0xff]
    %v104 = vld [vmem:[#allocation5 + $0xb0] sm:$0xff]
    %v105 = vld [vmem:[#allocation5 + $0xb8] sm:$0xff]
    %v106 = vld [vmem:[#allocation5 + $0xc0] sm:$0xff]
    %v107 = vld [vmem:[#allocation5 + $0xc8] sm:$0xff]
    %v108 = vld [vmem:[#allocation5 + $0xd0] sm:$0xff]
    %v109 = vld [vmem:[#allocation5 + $0xd8] sm:$0xff]
    %v110 = vld [vmem:[#allocation5 + $0xe0] sm:$0xff]
    %v111 = vld [vmem:[#allocation5 + $0xe8] sm:$0xff]
    %v112 = vld [vmem:[#allocation5 + $0xf0] sm:$0xff]
    %v113 = vld [vmem:[#allocation5 + $0xf8] sm:$0xff]
    %v114 = vld [vmem:[#allocation5 + $0x100] sm:$0xff]
    %v115 = vld [vmem:[#allocation5 + $0x108] sm:$0xff]
    %v116 = vld [vmem:[#allocation5 + $0x110] sm:$0xff]
    %v117 = vld [vmem:[#allocation5 + $0x118] sm:$0xff]
    %v118 = vld [vmem:[#allocation5 + $0x120] sm:$0xff]
    %v119 = vld [vmem:[#allocation5 + $0x128] sm:$0xf]
    %v120 = vlaneseq
    %v121 = vand.u32 %v120, 127
    %vm122 = vcmp.gt.f32.partialorder %v82, 0.0
    %vm123 = vcmp.gt.f32.partialorder %v83, 0.0
    %vm124 = vcmp.gt.f32.partialorder %v84, 0.0
    %vm125 = vcmp.gt.f32.partialorder %v85, 0.0
    %vm126 = vcmp.gt.f32.partialorder %v86, 0.0
    %vm127 = vcmp.gt.f32.partialorder %v87, 0.0
    %vm128 = vcmp.gt.f32.partialorder %v88, 0.0
    %vm129 = vcmp.gt.f32.partialorder %v89, 0.0
    %vm130 = vcmp.gt.f32.partialorder %v90, 0.0
    %vm131 = vcmp.gt.f32.partialorder %v91, 0.0
    %vm132 = vcmp.gt.f32.partialorder %v92, 0.0
    %vm133 = vcmp.gt.f32.partialorder %v93, 0.0
    %vm134 = vcmp.gt.f32.partialorder %v94, 0.0
    %vm135 = vcmp.gt.f32.partialorder %v95, 0.0
    %vm136 = vcmp.gt.f32.partialorder %v96, 0.0
    %vm137 = vcmp.gt.f32.partialorder %v97, 0.0
    %vm138 = vcmp.gt.f32.partialorder %v98, 0.0
    %vm139 = vcmp.gt.f32.partialorder %v99, 0.0
    %vm140 = vcmp.gt.f32.partialorder %v100, 0.0
    %vm141 = vcmp.gt.f32.partialorder %v101, 0.0
    %vm142 = vcmp.gt.f32.partialorder %v102, 0.0
    %vm143 = vcmp.gt.f32.partialorder %v103, 0.0
    %vm144 = vcmp.gt.f32.partialorder %v104, 0.0
    %vm145 = vcmp.gt.f32.partialorder %v105, 0.0
    %vm146 = vcmp.gt.f32.partialorder %v106, 0.0
    %vm147 = vcmp.gt.f32.partialorder %v107, 0.0
    %vm148 = vcmp.gt.f32.partialorder %v108, 0.0
    %vm149 = vcmp.gt.f32.partialorder %v109, 0.0
    %vm150 = vcmp.gt.f32.partialorder %v110, 0.0
    %vm151 = vcmp.gt.f32.partialorder %v111, 0.0
    %vm152 = vcmp.gt.f32.partialorder %v112, 0.0
    %vm153 = vcmp.gt.f32.partialorder %v113, 0.0
    %vm154 = vcmp.gt.f32.partialorder %v114, 0.0
    %vm155 = vcmp.gt.f32.partialorder %v115, 0.0
    %vm156 = vcmp.gt.f32.partialorder %v116, 0.0
    %vm157 = vcmp.gt.f32.partialorder %v117, 0.0
    %vm158 = vcmp.gt.f32.partialorder %v118, 0.0
    %vm159 = vcmp.gt.f32.partialorder %v119, 0.0
    %vm160 = vcmp.ne.s32.totalorder %v121, 3
    %vm161 = vmand %vm122, %vm160
    %vm162 = vmand %vm123, %vm160
    %vm163 = vmand %vm124, %vm160
    %vm164 = vmand %vm125, %vm160
    %vm165 = vmand %vm126, %vm160
    %vm166 = vmand %vm127, %vm160
    %vm167 = vmand %vm128, %vm160
    %vm168 = vmand %vm129, %vm160
    %vm169 = vmand %vm130, %vm160
    %vm170 = vmand %vm131, %vm160
    %vm171 = vmand %vm132, %vm160
    %vm172 = vmand %vm133, %vm160
    %vm173 = vmand %vm134, %vm160
    %vm174 = vmand %vm135, %vm160
    %vm175 = vmand %vm136, %vm160
    %vm176 = vmand %vm137, %vm160
    %vm177 = vmand %vm138, %vm160
    %vm178 = vmand %vm139, %vm160
    %vm179 = vmand %vm140, %vm160
    %vm180 = vmand %vm141, %vm160
    %vm181 = vmand %vm142, %vm160
    %vm182 = vmand %vm143, %vm160
    %vm183 = vmand %vm144, %vm160
    %vm184 = vmand %vm145, %vm160
    %vm185 = vmand %vm146, %vm160
    %vm186 = vmand %vm147, %vm160
    %vm187 = vmand %vm148, %vm160
    %vm188 = vmand %vm149, %vm160
    %vm189 = vmand %vm150, %vm160
    %vm190 = vmand %vm151, %vm160
    %vm191 = vmand %vm152, %vm160
    %vm192 = vmand %vm153, %vm160
    %vm193 = vmand %vm154, %vm160
    %vm194 = vmand %vm155, %vm160
    %vm195 = vmand %vm156, %vm160
    %vm196 = vmand %vm157, %vm160
    %vm197 = vmand %vm158, %vm160
    %vm198 = vmand %vm159, %vm160
    %v199 = vsel %vm161, %v82, 1.0
    %v200 = vsel %vm162, %v83, 1.0
    %v201 = vsel %vm163, %v84, 1.0
    %v202 = vsel %vm164, %v85, 1.0
    %v203 = vsel %vm165, %v86, 1.0
    %v204 = vsel %vm166, %v87, 1.0
    %v205 = vsel %vm167, %v88, 1.0
    %v206 = vsel %vm168, %v89, 1.0
    %v207 = vsel %vm169, %v90, 1.0
    %v208 = vsel %vm170, %v91, 1.0
    %v209 = vsel %vm171, %v92, 1.0
    %v210 = vsel %vm172, %v93, 1.0
    %v211 = vsel %vm173, %v94, 1.0
    %v212 = vsel %vm174, %v95, 1.0
    %v213 = vsel %vm175, %v96, 1.0
    %v214 = vsel %vm176, %v97, 1.0
    %v215 = vsel %vm177, %v98, 1.0
    %v216 = vsel %vm178, %v99, 1.0
    %v217 = vsel %vm179, %v100, 1.0
    %v218 = vsel %vm180, %v101, 1.0
    %v219 = vsel %vm181, %v102, 1.0
    %v220 = vsel %vm182, %v103, 1.0
    %v221 = vsel %vm183, %v104, 1.0
    %v222 = vsel %vm184, %v105, 1.0
    %v223 = vsel %vm185, %v106, 1.0
    %v224 = vsel %vm186, %v107, 1.0
    %v225 = vsel %vm187, %v108, 1.0
    %v226 = vsel %vm188, %v109, 1.0
    %v227 = vsel %vm189, %v110, 1.0
    %v228 = vsel %vm190, %v111, 1.0
    %v229 = vsel %vm191, %v112, 1.0
    %v230 = vsel %vm192, %v113, 1.0
    %v231 = vsel %vm193, %v114, 1.0
    %v232 = vsel %vm194, %v115, 1.0
    %v233 = vsel %vm195, %v116, 1.0
    %v234 = vsel %vm196, %v117, 1.0
    %v235 = vsel %vm197, %v118, 1.0
    %v236 = vsel %vm198, %v119, 1.0
    %v237 = vlog2.pop %v199
    %v238 = vmul.f32 %v237, 0.6931472
    %v239 = vlog2.pop %v200
    %v240 = vmul.f32 %v239, 0.6931472
    %v241 = vlog2.pop %v201
    %v242 = vmul.f32 %v241, 0.6931472
    %v243 = vlog2.pop %v202
    %v244 = vmul.f32 %v243, 0.6931472
    %v245 = vlog2.pop %v203
    %v246 = vmul.f32 %v245, 0.6931472
    %v247 = vlog2.pop %v204
    %v248 = vmul.f32 %v247, 0.6931472
    %v249 = vlog2.pop %v205
    %v250 = vmul.f32 %v249, 0.6931472
    %v251 = vlog2.pop %v206
    %v252 = vmul.f32 %v251, 0.6931472
    %v253 = vlog2.pop %v207
    %v254 = vmul.f32 %v253, 0.6931472
    %v255 = vlog2.pop %v208
    %v256 = vmul.f32 %v255, 0.6931472
    %v257 = vlog2.pop %v209
    %v258 = vmul.f32 %v257, 0.6931472
    %v259 = vlog2.pop %v210
    %v260 = vmul.f32 %v259, 0.6931472
    %v261 = vlog2.pop %v211
    %v262 = vmul.f32 %v261, 0.6931472
    %v263 = vlog2.pop %v212
    %v264 = vmul.f32 %v263, 0.6931472
    %v265 = vlog2.pop %v213
    %v266 = vmul.f32 %v265, 0.6931472
    %v267 = vlog2.pop %v214
    %v268 = vmul.f32 %v267, 0.6931472
    %v269 = vlog2.pop %v215
    %v270 = vmul.f32 %v269, 0.6931472
    %v271 = vlog2.pop %v216
    %v272 = vmul.f32 %v271, 0.6931472
    %v273 = vlog2.pop %v217
    %v274 = vmul.f32 %v273, 0.6931472
    %v275 = vlog2.pop %v218
    %v276 = vmul.f32 %v275, 0.6931472
    %v277 = vlog2.pop %v219
    %v278 = vmul.f32 %v277, 0.6931472
    %v279 = vlog2.pop %v220
    %v280 = vmul.f32 %v279, 0.6931472
    %v281 = vlog2.pop %v221
    %v282 = vmul.f32 %v281, 0.6931472
    %v283 = vlog2.pop %v222
    %v284 = vmul.f32 %v283, 0.6931472
    %v285 = vlog2.pop %v223
    %v286 = vmul.f32 %v285, 0.6931472
    %v287 = vlog2.pop %v224
    %v288 = vmul.f32 %v287, 0.6931472
    %v289 = vlog2.pop %v225
    %v290 = vmul.f32 %v289, 0.6931472
    %v291 = vlog2.pop %v226
    %v292 = vmul.f32 %v291, 0.6931472
    %v293 = vlog2.pop %v227
    %v294 = vmul.f32 %v293, 0.6931472
    %v295 = vlog2.pop %v228
    %v296 = vmul.f32 %v295, 0.6931472
    %v297 = vlog2.pop %v229
    %v298 = vmul.f32 %v297, 0.6931472
    %v299 = vlog2.pop %v230
    %v300 = vmul.f32 %v299, 0.6931472
    %v301 = vlog2.pop %v231
    %v302 = vmul.f32 %v301, 0.6931472
    %v303 = vlog2.pop %v232
    %v304 = vmul.f32 %v303, 0.6931472
    %v305 = vlog2.pop %v233
    %v306 = vmul.f32 %v305, 0.6931472
    %v307 = vlog2.pop %v234
    %v308 = vmul.f32 %v307, 0.6931472
    %v309 = vlog2.pop %v235
    %v310 = vmul.f32 %v309, 0.6931472
    %v311 = vlog2.pop %v236
    %v312 = vmul.f32 %v311, 0.6931472
    %v313 = vsub.f32 %v238, %v44
    %v314 = vsub.f32 %v240, %v45
    %v315 = vsub.f32 %v242, %v46
    %v316 = vsub.f32 %v244, %v47
    %v317 = vsub.f32 %v246, %v48
    %v318 = vsub.f32 %v248, %v49
    %v319 = vsub.f32 %v250, %v50
    %v320 = vsub.f32 %v252, %v51
    %v321 = vsub.f32 %v254, %v52
    %v322 = vsub.f32 %v256, %v53
    %v323 = vsub.f32 %v258, %v54
    %v324 = vsub.f32 %v260, %v55
    %v325 = vsub.f32 %v262, %v56
    %v326 = vsub.f32 %v264, %v57
    %v327 = vsub.f32 %v266, %v58
    %v328 = vsub.f32 %v268, %v59
    %v329 = vsub.f32 %v270, %v60
    %v330 = vsub.f32 %v272, %v61
    %v331 = vsub.f32 %v274, %v62
    %v332 = vsub.f32 %v276, %v63
    %v333 = vsub.f32 %v278, %v64
    %v334 = vsub.f32 %v280, %v65
    %v335 = vsub.f32 %v282, %v66
    %v336 = vsub.f32 %v284, %v67
    %v337 = vsub.f32 %v286, %v68
    %v338 = vsub.f32 %v288, %v69
    %v339 = vsub.f32 %v290, %v70
    %v340 = vsub.f32 %v292, %v71
    %v341 = vsub.f32 %v294, %v72
    %v342 = vsub.f32 %v296, %v73
    %v343 = vsub.f32 %v298, %v74
    %v344 = vsub.f32 %v300, %v75
    %v345 = vsub.f32 %v302, %v76
    %v346 = vsub.f32 %v304, %v77
    %v347 = vsub.f32 %v306, %v78
    %v348 = vsub.f32 %v308, %v79
    %v349 = vsub.f32 %v310, %v80
    %v350 = vsub.f32 %v312, %v81
    %v351 = vmul.f32 %v82, %v313
    %v352 = vmul.f32 %v83, %v314
    %v353 = vmul.f32 %v84, %v315
    %v354 = vmul.f32 %v85, %v316
    %v355 = vmul.f32 %v86, %v317
    %v356 = vmul.f32 %v87, %v318
    %v357 = vmul.f32 %v88, %v319
    %v358 = vmul.f32 %v89, %v320
    %v359 = vmul.f32 %v90, %v321
    %v360 = vmul.f32 %v91, %v322
    %v361 = vmul.f32 %v92, %v323
    %v362 = vmul.f32 %v93, %v324
    %v363 = vmul.f32 %v94, %v325
    %v364 = vmul.f32 %v95, %v326
    %v365 = vmul.f32 %v96, %v327
    %v366 = vmul.f32 %v97, %v328
    %v367 = vmul.f32 %v98, %v329
    %v368 = vmul.f32 %v99, %v330
    %v369 = vmul.f32 %v100, %v331
    %v370 = vmul.f32 %v101, %v332
    %v371 = vmul.f32 %v102, %v333
    %v372 = vmul.f32 %v103, %v334
    %v373 = vmul.f32 %v104, %v335
    %v374 = vmul.f32 %v105, %v336
    %v375 = vmul.f32 %v106, %v337
    %v376 = vmul.f32 %v107, %v338
    %v377 = vmul.f32 %v108, %v339
    %v378 = vmul.f32 %v109, %v340
    %v379 = vmul.f32 %v110, %v341
    %v380 = vmul.f32 %v111, %v342
    %v381 = vmul.f32 %v112, %v343
    %v382 = vmul.f32 %v113, %v344
    %v383 = vmul.f32 %v114, %v345
    %v384 = vmul.f32 %v115, %v346
    %v385 = vmul.f32 %v116, %v347
    %v386 = vmul.f32 %v117, %v348
    %v387 = vmul.f32 %v118, %v349
    %v388 = vmul.f32 %v119, %v350
    %v389 = vsel %vm161, %v351, 0.0
    %v390 = vsel %vm162, %v352, 0.0
    %v391 = vsel %vm163, %v353, 0.0
    %v392 = vsel %vm164, %v354, 0.0
    %v393 = vsel %vm165, %v355, 0.0
    %v394 = vsel %vm166, %v356, 0.0
    %v395 = vsel %vm167, %v357, 0.0
    %v396 = vsel %vm168, %v358, 0.0
    %v397 = vsel %vm169, %v359, 0.0
    %v398 = vsel %vm170, %v360, 0.0
    %v399 = vsel %vm171, %v361, 0.0
    %v400 = vsel %vm172, %v362, 0.0
    %v401 = vsel %vm173, %v363, 0.0
    %v402 = vsel %vm174, %v364, 0.0
    %v403 = vsel %vm175, %v365, 0.0
    %v404 = vsel %vm176, %v366, 0.0
    %v405 = vsel %vm177, %v367, 0.0
    %v406 = vsel %vm178, %v368, 0.0
    %v407 = vsel %vm179, %v369, 0.0
    %v408 = vsel %vm180, %v370, 0.0
    %v409 = vsel %vm181, %v371, 0.0
    %v410 = vsel %vm182, %v372, 0.0
    %v411 = vsel %vm183, %v373, 0.0
    %v412 = vsel %vm184, %v374, 0.0
    %v413 = vsel %vm185, %v375, 0.0
    %v414 = vsel %vm186, %v376, 0.0
    %v415 = vsel %vm187, %v377, 0.0
    %v416 = vsel %vm188, %v378, 0.0
    %v417 = vsel %vm189, %v379, 0.0
    %v418 = vsel %vm190, %v380, 0.0
    %v419 = vsel %vm191, %v381, 0.0
    %v420 = vsel %vm192, %v382, 0.0
    %v421 = vsel %vm193, %v383, 0.0
    %v422 = vsel %vm194, %v384, 0.0
    %v423 = vsel %vm195, %v385, 0.0
    %v424 = vsel %vm196, %v386, 0.0
    %v425 = vsel %vm197, %v387, 0.0
    %v426 = vsel %vm198, %v388, 0.0
    %427 = vadd.xlane.f32.xlu0 %v389
    %v428 = vpop.xlane.xlu0 %427
    %429 = vadd.xlane.f32.xlu0 %v390
    %v430 = vpop.xlane.xlu0 %429
    %431 = vadd.xlane.f32.xlu0 %v391
    %v432 = vpop.xlane.xlu0 %431
    %433 = vadd.xlane.f32.xlu0 %v392
    %v434 = vpop.xlane.xlu0 %433
    %435 = vadd.xlane.f32.xlu0 %v393
    %v436 = vpop.xlane.xlu0 %435
    %437 = vadd.xlane.f32.xlu0 %v394
    %v438 = vpop.xlane.xlu0 %437
    %439 = vadd.xlane.f32.xlu0 %v395
    %v440 = vpop.xlane.xlu0 %439
    %441 = vadd.xlane.f32.xlu0 %v396
    %v442 = vpop.xlane.xlu0 %441
    %443 = vadd.xlane.f32.xlu0 %v397
    %v444 = vpop.xlane.xlu0 %443
    %445 = vadd.xlane.f32.xlu0 %v398
    %v446 = vpop.xlane.xlu0 %445
    %447 = vadd.xlane.f32.xlu0 %v399
    %v448 = vpop.xlane.xlu0 %447
    %449 = vadd.xlane.f32.xlu0 %v400
    %v450 = vpop.xlane.xlu0 %449
    %451 = vadd.xlane.f32.xlu0 %v401
    %v452 = vpop.xlane.xlu0 %451
    %453 = vadd.xlane.f32.xlu0 %v402
    %v454 = vpop.xlane.xlu0 %453
    %455 = vadd.xlane.f32.xlu0 %v403
    %v456 = vpop.xlane.xlu0 %455
    %457 = vadd.xlane.f32.xlu0 %v404
    %v458 = vpop.xlane.xlu0 %457
    %459 = vadd.xlane.f32.xlu0 %v405
    %v460 = vpop.xlane.xlu0 %459
    %461 = vadd.xlane.f32.xlu0 %v406
    %v462 = vpop.xlane.xlu0 %461
    %463 = vadd.xlane.f32.xlu0 %v407
    %v464 = vpop.xlane.xlu0 %463
    %465 = vadd.xlane.f32.xlu0 %v408
    %v466 = vpop.xlane.xlu0 %465
    %467 = vadd.xlane.f32.xlu0 %v409
    %v468 = vpop.xlane.xlu0 %467
    %469 = vadd.xlane.f32.xlu0 %v410
    %v470 = vpop.xlane.xlu0 %469
    %471 = vadd.xlane.f32.xlu0 %v411
    %v472 = vpop.xlane.xlu0 %471
    %473 = vadd.xlane.f32.xlu0 %v412
    %v474 = vpop.xlane.xlu0 %473
    %475 = vadd.xlane.f32.xlu0 %v413
    %v476 = vpop.xlane.xlu0 %475
    %477 = vadd.xlane.f32.xlu0 %v414
    %v478 = vpop.xlane.xlu0 %477
    %479 = vadd.xlane.f32.xlu0 %v415
    %v480 = vpop.xlane.xlu0 %479
    %481 = vadd.xlane.f32.xlu0 %v416
    %v482 = vpop.xlane.xlu0 %481
    %483 = vadd.xlane.f32.xlu0 %v417
    %v484 = vpop.xlane.xlu0 %483
    %485 = vadd.xlane.f32.xlu0 %v418
    %v486 = vpop.xlane.xlu0 %485
    %487 = vadd.xlane.f32.xlu0 %v419
    %v488 = vpop.xlane.xlu0 %487
    %489 = vadd.xlane.f32.xlu0 %v420
    %v490 = vpop.xlane.xlu0 %489
    %491 = vadd.xlane.f32.xlu0 %v421
    %v492 = vpop.xlane.xlu0 %491
    %493 = vadd.xlane.f32.xlu0 %v422
    %v494 = vpop.xlane.xlu0 %493
    %495 = vadd.xlane.f32.xlu0 %v423
    %v496 = vpop.xlane.xlu0 %495
    %497 = vadd.xlane.f32.xlu0 %v424
    %v498 = vpop.xlane.xlu0 %497
    %499 = vadd.xlane.f32.xlu0 %v425
    %v500 = vpop.xlane.xlu0 %499
    %vm501 = vcmask 1043456
    %v502 = vsel %vm501, %v426, 0.0
    %503 = vadd.xlane.f32.xlu0 %v502
    %v504 = vpop.xlane.xlu0 %503
    %505 = vxpose.xlu0.b32.start [1/16] %v428, 128
    %506 = vxpose.xlu0.b32.cont [2/16] %v430, 128
    %507 = vxpose.xlu0.b32.cont [3/16] %v432, 128
    %508 = vxpose.xlu0.b32.cont [4/16] %v434, 128
    %509 = vxpose.xlu0.b32.cont [5/16] %v436, 128
    %510 = vxpose.xlu0.b32.cont [6/16] %v438, 128
    %511 = vxpose.xlu0.b32.cont [7/16] %v440, 128
    %512 = vxpose.xlu0.b32.cont [8/16] %v442, 128
    %513 = vxpose.xlu0.b32.cont [9/16] %v444, 128
    %514 = vxpose.xlu0.b32.cont [10/16] %v446, 128
    %515 = vxpose.xlu0.b32.cont [11/16] %v448, 128
    %516 = vxpose.xlu0.b32.cont [12/16] %v450, 128
    %517 = vxpose.xlu0.b32.cont [13/16] %v452, 128
    %518 = vxpose.xlu0.b32.cont [14/16] %v454, 128
    %519 = vxpose.xlu0.b32.cont [15/16] %v456, 128
    %520 = vxpose.xlu0.b32.end [16/16] %v458, 128
    %v521 = vpop.trf.xlu0
    %v522 = vpop.trf.xlu0
    %v523 = vpop.trf.xlu0
    %v524 = vpop.trf.xlu0
    %v525 = vpop.trf.xlu0
    %v526 = vpop.trf.xlu0
    %v527 = vpop.trf.xlu0
    %v528 = vpop.trf.xlu0
    %v529 = vpop.trf.xlu0
    %v530 = vpop.trf.xlu0
    %v531 = vpop.trf.xlu0
    %v532 = vpop.trf.xlu0
    %v533 = vpop.trf.xlu0
    %v534 = vpop.trf.xlu0
    %v535 = vpop.trf.xlu0
    %v536 = vpop.trf.xlu0
    %537 = vxpose.xlu0.b32.start [1/16] %v460, 128
    %538 = vxpose.xlu0.b32.cont [2/16] %v462, 128
    %539 = vxpose.xlu0.b32.cont [3/16] %v464, 128
    %540 = vxpose.xlu0.b32.cont [4/16] %v466, 128
    %541 = vxpose.xlu0.b32.cont [5/16] %v468, 128
    %542 = vxpose.xlu0.b32.cont [6/16] %v470, 128
    %543 = vxpose.xlu0.b32.cont [7/16] %v472, 128
    %544 = vxpose.xlu0.b32.cont [8/16] %v474, 128
    %545 = vxpose.xlu0.b32.cont [9/16] %v476, 128
    %546 = vxpose.xlu0.b32.cont [10/16] %v478, 128
    %547 = vxpose.xlu0.b32.cont [11/16] %v480, 128
    %548 = vxpose.xlu0.b32.cont [12/16] %v482, 128
    %549 = vxpose.xlu0.b32.cont [13/16] %v484, 128
    %550 = vxpose.xlu0.b32.cont [14/16] %v486, 128
    %551 = vxpose.xlu0.b32.cont [15/16] %v488, 128
    %552 = vxpose.xlu0.b32.end [16/16] %v490, 128
    %v553 = vpop.trf.xlu0
    %v554 = vpop.trf.xlu0
    %v555 = vpop.trf.xlu0
    %v556 = vpop.trf.xlu0
    %v557 = vpop.trf.xlu0
    %v558 = vpop.trf.xlu0
    %v559 = vpop.trf.xlu0
    %v560 = vpop.trf.xlu0
    %v561 = vpop.trf.xlu0
    %v562 = vpop.trf.xlu0
    %v563 = vpop.trf.xlu0
    %v564 = vpop.trf.xlu0
    %v565 = vpop.trf.xlu0
    %v566 = vpop.trf.xlu0
    %v567 = vpop.trf.xlu0
    %v568 = vpop.trf.xlu0
    %569 = vxpose.xlu0.b32.start [1/16] %v492, 128
    %570 = vxpose.xlu0.b32.cont [2/16] %v494, 128
    %571 = vxpose.xlu0.b32.cont [3/16] %v496, 128
    %572 = vxpose.xlu0.b32.cont [4/16] %v498, 128
    %573 = vxpose.xlu0.b32.cont [5/16] %v500, 128
    %574 = vxpose.xlu0.b32.cont [6/16] %v504, 128
    %575 = vxpose.xlu0.b32.cont [7/16] 0.0, 128
    %576 = vxpose.xlu0.b32.cont [8/16] 0.0, 128
    %577 = vxpose.xlu0.b32.cont [9/16] 0.0, 128
    %578 = vxpose.xlu0.b32.cont [10/16] 0.0, 128
    %579 = vxpose.xlu0.b32.cont [11/16] 0.0, 128
    %580 = vxpose.xlu0.b32.cont [12/16] 0.0, 128
    %581 = vxpose.xlu0.b32.cont [13/16] 0.0, 128
    %582 = vxpose.xlu0.b32.cont [14/16] 0.0, 128
    %583 = vxpose.xlu0.b32.cont [15/16] 0.0, 128
    %584 = vxpose.xlu0.b32.end [16/16] 0.0, 128
    %v585 = vpop.trf.xlu0
    %v586 = vpop.trf.xlu0
    %v587 = vpop.trf.xlu0
    %v588 = vpop.trf.xlu0
    %v589 = vpop.trf.xlu0
    %v590 = vpop.trf.xlu0
    %v591 = vpop.trf.xlu0
    %v592 = vpop.trf.xlu0
    %v593 = vpop.trf.xlu0
    %v594 = vpop.trf.xlu0
    %v595 = vpop.trf.xlu0
    %v596 = vpop.trf.xlu0
    %v597 = vpop.trf.xlu0
    %v598 = vpop.trf.xlu0
    %v599 = vpop.trf.xlu0
    %v600 = vpop.trf.xlu0
    %v604 = vrot.slane %v553, 7
    %v605 = vrot.slane %v585, 6
    %vm606 = vcmask 1040384
    %v607 = vsel %vm606, %v521, %v604
    %vm608 = vcmask 1041408
    %v609 = vsel %vm608, %v607, %v605
    %v611 = vlaneseq
    %vm612 = vcmp.ge.s32.totalorder %v611, 0
    %vm613 = vcmp.lt.s32.totalorder %v611, 300
    %vm614 = vmand %vm612, %vm613
    %615 = vst.msk [vmem:[#allocation7] sm:$0x7] %vm614, %v609
    // Predicated region
    $region18: #{tpu_custom_call.1} parent=1 // pred_check
      _
    $region19: #{tpu_custom_call.1} parent=1 // pred_check_branch
      %617 = sbr.rel (0) target = $region21
    $region20: #{tpu_custom_call.1} parent=1 // pred_region
      %619 = vsyncadd [#allocation4], 0
      %s621 = sshll.u32 [#allocation7], 4
      %s622 = int_to_ptr.vmem [resolvable:$true] %s621
      %s623 = sshll.u32 %s2, 4
      %s624 = int_to_ptr.hbm [resolvable:$true] %s623
      %626 = dma.vmem_to_hbm [thread:$0]  %s622, 48, %s624, [#allocation4]
    $region21: #{tpu_custom_call.1} parent=1 // pred_fallthru
      _
    // Predicated region
    $region22: #{tpu_custom_call.1} parent=1 // pred_check
      _
    $region23: #{tpu_custom_call.1} parent=1 // pred_check_branch
      %628 = sbr.rel (0) target = $region25
    $region24: #{tpu_custom_call.1} parent=1 // pred_region
      %630 = dma.done [#allocation4], 48
    $region25: #{tpu_custom_call.1} parent=1 // pred_fallthru
      _
    %631 = vsyncpa [#allocation3], 1
    %632 = vsyncpa [#allocation6], 1
    %633 = vsyncpa [#allocation4], 1

</llo_original>
